<compile_context>
chip_gen: v7x
topology: tpu7x:2x2x1
jax: 0.10.0
libtpu: 0.0.40
codegen_flags: <defaults>
</compile_context>

<pallas_src>
import math

import jax
import jax.numpy as jnp
from jax.experimental import pallas as pl
from jax.experimental.pallas import tpu as pltpu

_GAUSS_W = 1.6638520956039429
_ISRU_EPS = 1e-16


def _dt_kernel(w_ref, z_ref, o_ref):
    """Elementwise hot path.

    w_ref: (2, tile_lane) effective per-column weights
           (row 0 -> ISRU branch, row 1 -> identity branch).
    z_ref: (tile_m, tile_lane) input tile.
    o_ref: (tile_m, tile_lane) output tile.
    """
    z = z_ref[...]
    w0 = w_ref[0:1, :]                       # (1, lane), broadcasts over sublanes
    w1 = w_ref[1:2, :]

    # 2*sigmoid(w*z) - 1 == tanh(0.5*w*z): one EUP tanh instead of exp+divide.
    t = jnp.tanh((0.5 * _GAUSS_W) * z)
    isru = t * jax.lax.rsqrt(1.0 - t * t + _ISRU_EPS)

    o_ref[...] = (isru * w0 + z * w1).astype(o_ref.dtype)


def _branches_jax(z, w0, w1):
    """Tiny pure-JAX tail path for the < k leftover rows."""
    t = jnp.tanh((0.5 * _GAUSS_W) * z)
    isru = t * jax.lax.rsqrt(1.0 - t * t + _ISRU_EPS)
    return isru * w0 + z * w1


def distribution_transformer_isru_gaussian(
    z, weight_shared, weight_independent, *, target_tile_bytes=4 * 1024 * 1024
):
    """z: (N, d) float32; weight_shared: (2,); weight_independent: (2, d)."""
    N, d = z.shape
    assert weight_shared.shape == (2,)
    assert weight_independent.shape == (2, d)

    # --- weight prep (done once, outside the kernel) ----------------------
    w_eff = (jnp.abs(weight_shared)[:, None]
             + jnp.abs(weight_independent)).astype(z.dtype)          # (2, d)

    # --- lane-dense packing ------------------------------------------------
    k = 128 // math.gcd(d, 128)              # rows folded into one packed row
    lane = k * d                             # multiple of 128
    n_main = (N // k) * k                    # rows handled by the packed kernel
    rem = N - n_main                         # < k leftover rows -> JAX tail

    outs = []
    if n_main > 0:
        m_total = n_main // k
        z_main = z[:n_main].reshape(m_total, lane)     # contiguous, no padding
        w_packed = jnp.tile(w_eff, (1, k)) if k > 1 else w_eff        # (2, lane)

        itemsize = jnp.dtype(z.dtype).itemsize

        # Lane tiling: only needed when lane is so wide that even an 8-row
        # block would exceed the budget (guards v7x's smaller VMEM).
        if lane <= 128 or 8 * lane * itemsize <= target_tile_bytes:
            tile_lane = lane
        else:
            tile_lane = max(128, (target_tile_bytes // (8 * itemsize)) // 128 * 128)
        grid_lane = pl.cdiv(lane, tile_lane)

        # Row tiling: big blocks, multiple of 8 sublanes, no overshoot.
        tile_m = max(8, (target_tile_bytes // (tile_lane * itemsize)) // 8 * 8)
        tile_m = min(tile_m, pl.cdiv(m_total, 8) * 8)

        # Keep >= 4 grid steps when possible so v7x's 2 TensorCores both stream.
        min_steps = 4
        if grid_lane * pl.cdiv(m_total, tile_m) < min_steps and m_total >= 8 * min_steps:
            cap = (m_total // min_steps) // 8 * 8
            if cap >= 8:
                tile_m = min(tile_m, cap)
        grid_m = pl.cdiv(m_total, tile_m)

        # Explicit VMEM budget: ~6 blocks (in/out double-buffered + slack),
        # independent of the per-generation default scoped limit.
        block_bytes = tile_m * tile_lane * itemsize
        w_block_bytes = 2 * tile_lane * itemsize
        vmem_limit = int(min(48 * 1024 * 1024,
                             max(16 * 1024 * 1024,
                                 6 * block_bytes + 4 * w_block_bytes + (2 << 20))))

        n_elems = m_total * lane
        cost = pl.CostEstimate(
            flops=8 * n_elems,
            transcendentals=2 * n_elems,                  # tanh + rsqrt
            bytes_accessed=2 * n_elems * itemsize + 2 * lane * itemsize,
        )

        out_main = pl.pallas_call(
            _dt_kernel,
            out_shape=jax.ShapeDtypeStruct((m_total, lane), z.dtype),
            grid_spec=pltpu.PrefetchScalarGridSpec(
                num_scalar_prefetch=0,
                grid=(grid_m, grid_lane),
                in_specs=[
                    # weights: (2, tile_lane), same rows every row-step
                    pl.BlockSpec((2, tile_lane), lambda i, j: (0, j)),
                    # z tile
                    pl.BlockSpec((tile_m, tile_lane), lambda i, j: (i, j)),
                ],
                out_specs=pl.BlockSpec((tile_m, tile_lane), lambda i, j: (i, j)),
            ),
            compiler_params=pltpu.CompilerParams(
                dimension_semantics=("parallel", "parallel"),
                vmem_limit_bytes=vmem_limit,
            ),
            cost_estimate=cost,
        )(w_packed, z_main)
        outs.append(out_main.reshape(n_main, d))

    if rem > 0:
        # < k (<=127) leftover rows: tiny JAX path instead of padding/copying z.
        outs.append(_branches_jax(z[n_main:], w_eff[0], w_eff[1]))

    if len(outs) == 1:
        return outs[0]
    return jnp.concatenate(outs, axis=0)


def _reference(z, ws, wi):
    """Pure-JAX mirror of the PyTorch forward (literal sigmoid/clip/divide form)."""
    cdf = 1.0 / (1.0 + jnp.exp(-_GAUSS_W * z))
    c = jnp.clip(cdf, _ISRU_EPS, 1.0 - _ISRU_EPS)
    t = 2.0 * c - 1.0
    isru = t / jnp.sqrt(1.0 - t * t + _ISRU_EPS)
    branches = [isru, z]
    x = jnp.zeros_like(z)
    for i in range(2):
        x = x + branches[i] * jnp.abs(ws[i])
        x = x + branches[i] * jnp.abs(wi[i, :])
    return x


if __name__ == "__main__":
    key = jax.random.PRNGKey(0)
    kz, kws, kwi, kz2, kz3, kwi3 = jax.random.split(key, 6)

    # Test 1: canonical small shape (d=32 -> pack k=4 rows per 128-lane row).
    d, N = 32, 16
    z = jax.random.normal(kz, (N, d), dtype=jnp.float32)
    weight_shared = 0.01 * jax.random.normal(kws, (2,), dtype=jnp.float32)
    weight_independent = 0.01 * jax.random.normal(kwi, (2, d), dtype=jnp.float32)

    out = distribution_transformer_isru_gaussian(z, weight_shared, weight_independent)
    out = jax.block_until_ready(out)
    ref = _reference(z, weight_shared, weight_independent)
    assert out.shape == (N, d)
    # tanh / rsqrt / pre-combined weights differ from the sigmoid+divide
    # reference by a few ulps (amplified near the ISRU pole).
    assert jnp.allclose(out, ref, atol=2e-4, rtol=2e-4), "mismatch (small)"

    # Test 2: ragged N (exercises multi-step grid, masked last block, JAX tail).
    N2 = 1037
    z2 = jax.random.normal(kz2, (N2, d), dtype=jnp.float32)
    out2 = distribution_transformer_isru_gaussian(
        z2, weight_shared, weight_independent, target_tile_bytes=16 * 1024)
    out2 = jax.block_until_ready(out2)
    ref2 = _reference(z2, weight_shared, weight_independent)
    assert out2.shape == (N2, d)
    assert jnp.allclose(out2, ref2, atol=2e-4, rtol=2e-4), "mismatch (ragged N)"

    # Test 3: 128-aligned d with a small tile budget (exercises k=1 zero-copy
    # packing and the lane-tiled grid axis).
    d3, N3 = 384, 40
    z3 = jax.random.normal(kz3, (N3, d3), dtype=jnp.float32)
    wi3 = 0.01 * jax.random.normal(kwi3, (2, d3), dtype=jnp.float32)
    out3 = distribution_transformer_isru_gaussian(
        z3, weight_shared, wi3, target_tile_bytes=4 * 1024)
    out3 = jax.block_until_ready(out3)
    ref3 = _reference(z3, weight_shared, wi3)
    assert out3.shape == (N3, d3)
    assert jnp.allclose(out3, ref3, atol=2e-4, rtol=2e-4), "mismatch (lane-tiled)"

    print("KERNEL_OK")
</pallas_src>

<mosaic_0001>
module attributes {stable_mosaic.version = 11 : i64} {
  func.func @_dt_kernel(%arg0: i32, %arg1: i32, %arg2: memref<2x128xf32, #tpu.memory_space<vmem>>, %arg3: memref<8x128xf32, #tpu.memory_space<vmem>>, %arg4: memref<8x128xf32, #tpu.memory_space<vmem>>) attributes {dimension_semantics = [#tpu.dimension_semantics<parallel>, #tpu.dimension_semantics<parallel>], iteration_bounds = array<i64: 1, 1>, scalar_prefetch = 0 : i64, scratch_operands = 0 : i64, tpu.core_type = #tpu.core_type<tc>, window_params = [{transform_indices = @transform_0, window_bounds = array<i64: 2, 128>}, {transform_indices = @transform_1, window_bounds = array<i64: 8, 128>}, {transform_indices = @transform_2, window_bounds = array<i64: 8, 128>}]} {
    %c0 = arith.constant 0 : index
    %c0_0 = arith.constant 0 : index
    %0 = vector.load %arg3[%c0, %c0_0] : memref<8x128xf32, #tpu.memory_space<vmem>>, vector<8x128xf32>
    %c0_1 = arith.constant 0 : index
    %c0_2 = arith.constant 0 : index
    %1 = vector.load %arg2[%c0_1, %c0_2] : memref<2x128xf32, #tpu.memory_space<vmem>>, vector<1x128xf32>
    %c1 = arith.constant 1 : index
    %c0_3 = arith.constant 0 : index
    %2 = vector.load %arg2[%c1, %c0_3] : memref<2x128xf32, #tpu.memory_space<vmem>>, vector<1x128xf32>
    %cst = arith.constant 0.831926047 : f32
    %3 = vector.broadcast %cst : f32 to vector<8x128xf32>
    %4 = arith.mulf %3, %0 : vector<8x128xf32>
    %5 = math.tanh %4 : vector<8x128xf32>
    %6 = arith.mulf %5, %5 : vector<8x128xf32>
    %cst_4 = arith.constant 1.000000e+00 : f32
    %7 = vector.broadcast %cst_4 : f32 to vector<8x128xf32>
    %8 = arith.subf %7, %6 : vector<8x128xf32>
    %cst_5 = arith.constant 1.000000e-16 : f32
    %9 = vector.broadcast %cst_5 : f32 to vector<8x128xf32>
    %10 = arith.addf %8, %9 : vector<8x128xf32>
    %11 = math.rsqrt %10 : vector<8x128xf32>
    %12 = arith.mulf %5, %11 : vector<8x128xf32>
    %13 = vector.broadcast %1 : vector<1x128xf32> to vector<8x128xf32>
    %14 = arith.mulf %12, %13 : vector<8x128xf32>
    %15 = vector.broadcast %2 : vector<1x128xf32> to vector<8x128xf32>
    %16 = arith.mulf %0, %15 : vector<8x128xf32>
    %17 = arith.addf %14, %16 : vector<8x128xf32>
    %c0_6 = arith.constant 0 : index
    %c0_7 = arith.constant 0 : index
    %18 = vector.load %arg4[%c0_6, %c0_7] : memref<8x128xf32, #tpu.memory_space<vmem>>, vector<8x128xf32>
    tpu.vector_store %arg4[%c0_6, %c0_7], %17 {strides = array<i32>} : memref<8x128xf32, #tpu.memory_space<vmem>>, vector<8x128xf32>,
    return
  }
  func.func @transform_0(%arg0: i32, %arg1: i32) -> (i32, i32) {
    %c0_i32 = arith.constant 0 : i32
    %c0_i32_0 = arith.constant 0 : i32
    return %c0_i32, %arg1 : i32, i32
  }
  func.func @transform_1(%arg0: i32, %arg1: i32) -> (i32, i32) {
    %c0_i32 = arith.constant 0 : i32
    return %arg0, %arg1 : i32, i32
  }
  func.func @transform_2(%arg0: i32, %arg1: i32) -> (i32, i32) {
    %c0_i32 = arith.constant 0 : i32
    return %arg0, %arg1 : i32, i32
  }
}

</mosaic_0001>

<llo_original>
// kernel: tpu_custom_call.1
$region0: #{tpu_custom_call.1}
  #allocation0 [shape = 'u32[]', space=smem, size = 0x4, offset = 0x4, fixed_abs, tag = 'smem constant byte address 0x4 - core index']
  #allocation1 [shape = 'u32[144,128]{1,0:T(1,128)}', space=vmem, size = 0x12000, scoped, tag = 'internal scratch']
  %s0 = inlined_call_operand.hbm [shape: f32[2,128], index: 0, kind: input, shape index: {}]
  %s1 = inlined_call_operand.hbm [shape: f32[4,128], index: 1, kind: input, shape index: {}]
  %s2 = inlined_call_operand.hbm [shape: f32[4,128], index: 2, kind: output, shape index: {}]
  %s3 = sld [smem:[#allocation0]]
  $region26: #{tpu_custom_call.1} parent=0
    _
  %s5 = ssub.s32 1, %s3
  %s6 = scalar_select 0, %s5, %s3
  $region1: #{tpu_custom_call.1} parent=0
    #allocation2 [shape = 'u8[1024]{0}', space=vmem, size = 0x400, scoped, tag = 'input window, operand 0, single buffered']
    #allocation3 [shape = 's32[1]{0}', space=sflag, size = 0x4, scoped, tag = 'scoped memory for tpu_custom_call.1']
    #allocation4 [shape = 's32[1]{0}', space=sflag, size = 0x4, scoped, tag = 'scoped memory for tpu_custom_call.1']
    #allocation5 [shape = 'u8[4096]{0}', space=vmem, size = 0x1000, scoped, tag = 'input window, operand 1, single buffered']
    #allocation6 [shape = 's32[1]{0}', space=sflag, size = 0x4, scoped, tag = 'scoped memory for tpu_custom_call.1']
    #allocation7 [shape = 'u8[4096]{0}', space=vmem, size = 0x1000, scoped, tag = 'output window, operand 0, single buffered']
    %7 = vsyncpa [#allocation3], 0
    %8 = vsyncpa [#allocation6], 0
    %9 = vsyncpa [#allocation4], 0
    // Predicated region
    $region2: #{tpu_custom_call.1} parent=1 // pred_check
      _
    $region3: #{tpu_custom_call.1} parent=1 // pred_check_branch
      %11 = sbr.rel (0) target = $region5
    $region4: #{tpu_custom_call.1} parent=1 // pred_region
      %s13 = ssub.s32 32, 32
      %14 = vsyncadd [#allocation3], %s13
      %s16 = sshll.u32 [#allocation2], 4
      %s17 = int_to_ptr.vmem [resolvable:$true] %s16
      %19 = dma.hbm_to_vmem [thread:$0]  %s0, 32, %s17, [#allocation3]
    $region5: #{tpu_custom_call.1} parent=1 // pred_fallthru
      _
    // Predicated region
    $region6: #{tpu_custom_call.1} parent=1 // pred_check
      _
    $region7: #{tpu_custom_call.1} parent=1 // pred_check_branch
      %21 = sbr.rel (0) target = $region9
    $region8: #{tpu_custom_call.1} parent=1 // pred_region
      %s23 = ssub.s32 128, 64
      %24 = vsyncadd [#allocation6], %s23
      %s25 = sshll.u32 [#allocation5], 4
      %s26 = int_to_ptr.vmem [resolvable:$true] %s25
      %31 = dma.hbm_to_vmem [thread:$0]  %s1, 64, %s26, [#allocation6], 64, 64, 4
    $region9: #{tpu_custom_call.1} parent=1 // pred_fallthru
      _
    // Predicated region
    $region10: #{tpu_custom_call.1} parent=1 // pred_check
      _
    $region11: #{tpu_custom_call.1} parent=1 // pred_check_branch
      %33 = sbr.rel (0) target = $region13
    $region12: #{tpu_custom_call.1} parent=1 // pred_region
      %34 = dma.done [#allocation3], 32
    $region13: #{tpu_custom_call.1} parent=1 // pred_fallthru
      _
    // Predicated region
    $region14: #{tpu_custom_call.1} parent=1 // pred_check
      _
    $region15: #{tpu_custom_call.1} parent=1 // pred_check_branch
      %36 = sbr.rel (0) target = $region17
    $region16: #{tpu_custom_call.1} parent=1 // pred_region
      %37 = dma.done [#allocation6], 128
    $region17: #{tpu_custom_call.1} parent=1 // pred_fallthru
      _
    %v38 = vld [vmem:[#allocation5] sm:$0xff]
    %v39 = vld [vmem:[#allocation2] sm:$0x1]
    %v40 = vld [vmem:[#allocation2 + $0x1] sm:$0x1]
    %v41 = vmul.f32 %v38, 0.83192605
    %v42 = vtanh.pop %v41
    %v43 = vmul.f32 %v42, %v42
    %v44 = vsub.f32 1.0, %v43
    %v45 = vadd.f32 %v44, 1e-16
    %v46 = vrsqrt.pop %v45
    %v47 = vmul.f32 %v42, %v46
    %v48 = vlaneseq
    %v49 = vshrl.u32 %v48, 7
    %v50 = vsub.s32 0, %v49
    %v51 = vrot.slane %v39, %v50
    %v52 = vmul.f32 %v47, %v51
    %v53 = vlaneseq
    %v54 = vshrl.u32 %v53, 7
    %v55 = vsub.s32 0, %v54
    %v56 = vrot.slane %v40, %v55
    %v57 = vmul.f32 %v38, %v56
    %v58 = vadd.f32 %v52, %v57
    %59 = vst [vmem:[#allocation7] sm:$0xff] %v58
    // Predicated region
    $region18: #{tpu_custom_call.1} parent=1 // pred_check
      _
    $region19: #{tpu_custom_call.1} parent=1 // pred_check_branch
      %61 = sbr.rel (0) target = $region21
    $region20: #{tpu_custom_call.1} parent=1 // pred_region
      %s63 = ssub.s32 128, 64
      %64 = vsyncadd [#allocation4], %s63
      %s65 = sshll.u32 [#allocation7], 4
      %s66 = int_to_ptr.vmem [resolvable:$true] %s65
      %71 = dma.vmem_to_hbm [thread:$0]  %s66, 64, %s2, [#allocation4], 64, 64, 4
    $region21: #{tpu_custom_call.1} parent=1 // pred_fallthru
      _
    // Predicated region
    $region22: #{tpu_custom_call.1} parent=1 // pred_check
      _
    $region23: #{tpu_custom_call.1} parent=1 // pred_check_branch
      %73 = sbr.rel (0) target = $region25
    $region24: #{tpu_custom_call.1} parent=1 // pred_region
      %74 = dma.done [#allocation4], 128
    $region25: #{tpu_custom_call.1} parent=1 // pred_fallthru
      _
    %75 = vsyncpa [#allocation3], 1
    %76 = vsyncpa [#allocation6], 1
    %77 = vsyncpa [#allocation4], 1

</llo_original>
